<compile_context>
chip_gen: v5e
topology: v5e:2x2
jax: 0.10.0
libtpu: 0.0.40
codegen_flags: <defaults>
</compile_context>

<pallas_src>
from functools import partial

import jax
import jax.numpy as jnp
from jax import lax
from jax.experimental import pallas as pl
from jax.experimental.pallas import tpu as pltpu


def _round_up(x, m):
    return ((x + m - 1) // m) * m


def _focal_factor(one_minus_scores, focal_power):
    """(1 - scores) ** focal_power, specialised for integer powers (VPU-only)."""
    if float(focal_power) == int(focal_power):
        p = int(focal_power)
        if p == 0:
            return None                          # factor == 1
        acc = one_minus_scores
        for _ in range(p - 1):                   # small ints: repeated multiply
            acc = acc * one_minus_scores
        return acc
    return jnp.power(one_minus_scores, focal_power)   # non-integer fallback (EUP)


def _wfl_kernel(n_rows, tile_n, focal_power,
                x_ref, t_ref, intra_ref, inter_ref, loss_ref, acc_ref):
    i = pl.program_id(0)

    @pl.when(i == 0)
    def _():
        acc_ref[...] = jnp.zeros_like(acc_ref)

    x = x_ref[...].astype(jnp.float32)         # (tile_n, C) logits
    t = t_ref[...].astype(jnp.float32)         # (tile_n, C) targets in {0, 1}
    pw = intra_ref[...].astype(jnp.float32)    # (1, C) pos_weight (intra-class)

    # Shared transcendentals: one exp + one log1p per element.
    e = jnp.exp(-jnp.abs(x))
    log1pe = jnp.log1p(e)
    sp_pos = jnp.maximum(x, 0.0) + log1pe      # softplus(x)
    sp_neg = jnp.maximum(-x, 0.0) + log1pe     # softplus(-x)
    probs = jnp.where(x >= 0.0, 1.0, e) / (1.0 + e)    # numerically stable sigmoid(x)

    # 1 - scores  ==  where(t == 1, 1 - probs, probs)
    one_minus_scores = jnp.where(t == 1.0, 1.0 - probs, probs)

    # F.binary_cross_entropy_with_logits(x, t, reduction='none', pos_weight=pw)
    cost = pw * t * sp_neg + (1.0 - t) * sp_pos

    factor = _focal_factor(one_minus_scores, focal_power)
    focal = cost if factor is None else factor * cost

    if n_rows % tile_n != 0:
        # Mask out zero-padded batch rows of the last tile.
        row = i * tile_n + lax.broadcasted_iota(jnp.int32, focal.shape, 0)
        focal = jnp.where(row < n_rows, focal, 0.0)

    acc_ref[...] += jnp.sum(focal, axis=0, keepdims=True)     # (1, C) partial sums

    @pl.when(i == pl.num_programs(0) - 1)
    def _():
        w = inter_ref[...].astype(jnp.float32)                # (1, C) inter-class
        c = w.shape[1]
        # mean over batch, weight per task, mean over tasks
        loss_ref[0, 0] = jnp.sum(acc_ref[...] * w) * (1.0 / (n_rows * c))


def weighted_focal_loss(output, target, intra_class_weights, inter_class_weights,
                        focal_power=1, tile_n=4096):
    """output, target: (N, C); intra/inter class weights: (C,). Returns scalar f32.

    output/target may be narrower dtypes (e.g. bf16 logits, int8/bool targets);
    they are cast to f32 inside the kernel, so narrow inputs cut HBM traffic."""
    n, c = output.shape
    intra = jnp.asarray(intra_class_weights, jnp.float32).reshape(1, c)
    inter = jnp.asarray(inter_class_weights, jnp.float32).reshape(1, c)

    # Batch tile: multiple of 8 sublanes, capped so double-buffered inputs stay
    # well inside the v7x (smallest) scoped-VMEM budget even for C ~ 128 f32.
    tn = min(int(tile_n), _round_up(n, 8))
    n_pad = _round_up(n, tn)
    if n_pad != n:
        output = jnp.pad(output, ((0, n_pad - n), (0, 0)))
        target = jnp.pad(target, ((0, n_pad - n), (0, 0)))
    grid = (n_pad // tn,)

    # TODO(synk): optional v7x dual-TensorCore split (leading 'parallel' grid axis
    # with per-core partial sums combined in the wrapper) is not implemented.
    out = pl.pallas_call(
        partial(_wfl_kernel, n, tn, focal_power),
        out_shape=jax.ShapeDtypeStruct((1, 1), jnp.float32),
        grid=grid,
        in_specs=[
            pl.BlockSpec((tn, c), lambda i: (i, 0)),     # logits  tile
            pl.BlockSpec((tn, c), lambda i: (i, 0)),     # targets tile
            pl.BlockSpec((1, c), lambda i: (0, 0)),      # intra-class weights (resident)
            pl.BlockSpec((1, c), lambda i: (0, 0)),      # inter-class weights (resident)
        ],
        out_specs=pl.BlockSpec((1, 1), lambda i: (0, 0), memory_space=pltpu.SMEM),
        scratch_shapes=[pltpu.VMEM((1, c), jnp.float32)],
        compiler_params=pltpu.CompilerParams(
            dimension_semantics=("arbitrary",)),
    )(output, target, intra, inter)
    return out[0, 0]


def _reference(output, target, intra, inter, focal_power=1):
    x = output.astype(jnp.float32)
    t = target.astype(jnp.float32)
    pw = intra.astype(jnp.float32)[None, :]
    w = inter.astype(jnp.float32)[None, :]
    probs = jax.nn.sigmoid(x)
    scores = jnp.where(t == 1.0, probs, 1.0 - probs)
    cost = pw * t * jax.nn.softplus(-x) + (1.0 - t) * jax.nn.softplus(x)
    focal = jnp.power(1.0 - scores, focal_power) * cost
    return jnp.mean(jnp.mean(focal, axis=0) * w[0])


if __name__ == "__main__":
    key = jax.random.PRNGKey(0)
    k1, k2, k3, k4, k5, k6 = jax.random.split(key, 6)

    # ---- primary check: C = full lane width, single tile, focal_power = 1 ----
    N, C = 8, 128
    output = jax.random.normal(k1, (N, C), dtype=jnp.float32) * 2.0
    target = jax.random.bernoulli(k2, p=0.3, shape=(N, C)).astype(jnp.float32)
    intra_w = jax.random.uniform(k3, (C,), minval=0.5, maxval=3.0)
    inter_w = jax.random.uniform(k4, (C,), minval=0.5, maxval=2.0)

    loss = weighted_focal_loss(output, target, intra_w, inter_w, focal_power=1)
    loss = jax.block_until_ready(loss)
    ref = _reference(output, target, intra_w, inter_w, focal_power=1)
    assert jnp.allclose(loss, ref, rtol=1e-5, atol=1e-5), (loss, ref)

    # ---- secondary check: multi-tile grid + padded/masked last tile, power = 2 ----
    N2, C2, TILE2 = 40, 32, 16
    out2 = jax.random.normal(k5, (N2, C2), dtype=jnp.float32) * 2.0
    tgt2 = jax.random.bernoulli(k6, p=0.4, shape=(N2, C2)).astype(jnp.float32)
    intra2 = jnp.linspace(0.5, 2.5, C2, dtype=jnp.float32)
    inter2 = jnp.linspace(2.0, 0.75, C2, dtype=jnp.float32)

    loss2 = weighted_focal_loss(out2, tgt2, intra2, inter2, focal_power=2,
                                tile_n=TILE2)
    loss2 = jax.block_until_ready(loss2)
    ref2 = _reference(out2, tgt2, intra2, inter2, focal_power=2)
    assert jnp.allclose(loss2, ref2, rtol=1e-5, atol=1e-5), (loss2, ref2)

    print("KERNEL_OK")
</pallas_src>

<mosaic_0001>
module attributes {stable_mosaic.version = 11 : i64} {
  func.func @_wfl_kernel(%arg0: i32, %arg1: memref<8x128xf32, #tpu.memory_space<vmem>>, %arg2: memref<8x128xf32, #tpu.memory_space<vmem>>, %arg3: memref<1x128xf32, #tpu.memory_space<vmem>>, %arg4: memref<1x128xf32, #tpu.memory_space<vmem>>, %arg5: memref<1x1xf32, #tpu.memory_space<smem>>, %arg6: memref<1x128xf32, #tpu.memory_space<vmem>>) attributes {dimension_semantics = [#tpu.dimension_semantics<arbitrary>], iteration_bounds = array<i64: 1>, scalar_prefetch = 0 : i64, scratch_operands = 1 : i64, tpu.core_type = #tpu.core_type<tc>, window_params = [{transform_indices = @transform_0, window_bounds = array<i64: 8, 128>}, {transform_indices = @transform_1, window_bounds = array<i64: 8, 128>}, {pipeline_mode = #tpu.pipeline_mode<synchronous>, transform_indices = @transform_2, window_bounds = array<i64: 1, 128>}, {pipeline_mode = #tpu.pipeline_mode<synchronous>, transform_indices = @transform_3, window_bounds = array<i64: 1, 128>}, {transform_indices = @transform_4, window_bounds = array<i64: 1, 1>}]} {
    %c0_i32 = arith.constant 0 : i32
    %0 = arith.cmpi eq, %arg0, %c0_i32 : i32
    %1 = arith.extui %0 : i1 to i32
    %c0_i32_0 = arith.constant 0 : i32
    %2 = arith.cmpi ne, %1, %c0_i32_0 : i32
    scf.if %2 {
      %cst_22 = arith.constant 0.000000e+00 : f32
      %47 = vector.broadcast %cst_22 : f32 to vector<1x128xf32>
      %c0_23 = arith.constant 0 : index
      %c0_24 = arith.constant 0 : index
      %48 = vector.load %arg6[%c0_23, %c0_24] : memref<1x128xf32, #tpu.memory_space<vmem>>, vector<1x128xf32>
      tpu.vector_store %arg6[%c0_23, %c0_24], %47 {strides = array<i32>} : memref<1x128xf32, #tpu.memory_space<vmem>>, vector<1x128xf32>,
    } else {
    }
    %c0 = arith.constant 0 : index
    %c0_1 = arith.constant 0 : index
    %3 = vector.load %arg1[%c0, %c0_1] : memref<8x128xf32, #tpu.memory_space<vmem>>, vector<8x128xf32>
    %c0_2 = arith.constant 0 : index
    %c0_3 = arith.constant 0 : index
    %4 = vector.load %arg2[%c0_2, %c0_3] : memref<8x128xf32, #tpu.memory_space<vmem>>, vector<8x128xf32>
    %c0_4 = arith.constant 0 : index
    %c0_5 = arith.constant 0 : index
    %5 = vector.load %arg3[%c0_4, %c0_5] : memref<1x128xf32, #tpu.memory_space<vmem>>, vector<1x128xf32>
    %6 = math.absf %3 : vector<8x128xf32>
    %cst = arith.constant 0.000000e+00 : f32
    %7 = vector.broadcast %cst : f32 to vector<8x128xf32>
    %8 = arith.subf %7, %6 : vector<8x128xf32>
    %9 = math.exp %8 : vector<8x128xf32>
    %10 = math.log1p %9 : vector<8x128xf32>
    %cst_6 = arith.constant 0.000000e+00 : f32
    %11 = vector.broadcast %cst_6 : f32 to vector<8x128xf32>
    %12 = arith.maximumf %3, %11 : vector<8x128xf32>
    %13 = arith.addf %12, %10 : vector<8x128xf32>
    %cst_7 = arith.constant 0.000000e+00 : f32
    %14 = vector.broadcast %cst_7 : f32 to vector<8x128xf32>
    %15 = arith.subf %14, %3 : vector<8x128xf32>
    %cst_8 = arith.constant 0.000000e+00 : f32
    %16 = vector.broadcast %cst_8 : f32 to vector<8x128xf32>
    %17 = arith.maximumf %15, %16 : vector<8x128xf32>
    %18 = arith.addf %17, %10 : vector<8x128xf32>
    %cst_9 = arith.constant 0.000000e+00 : f32
    %19 = vector.broadcast %cst_9 : f32 to vector<8x128xf32>
    %20 = arith.cmpf oge, %3, %19 : vector<8x128xf32>
    %cst_10 = arith.constant 1.000000e+00 : f32
    %21 = vector.broadcast %cst_10 : f32 to vector<8x128xf32>
    %22 = arith.select %20, %21, %9 : vector<8x128xi1>, vector<8x128xf32>
    %cst_11 = arith.constant 1.000000e+00 : f32
    %23 = vector.broadcast %cst_11 : f32 to vector<8x128xf32>
    %24 = arith.addf %23, %9 : vector<8x128xf32>
    %25 = arith.divf %22, %24 : vector<8x128xf32>
    %cst_12 = arith.constant 1.000000e+00 : f32
    %26 = vector.broadcast %cst_12 : f32 to vector<8x128xf32>
    %27 = arith.cmpf oeq, %4, %26 : vector<8x128xf32>
    %cst_13 = arith.constant 1.000000e+00 : f32
    %28 = vector.broadcast %cst_13 : f32 to vector<8x128xf32>
    %29 = arith.subf %28, %25 : vector<8x128xf32>
    %30 = arith.select %27, %29, %25 : vector<8x128xi1>, vector<8x128xf32>
    %31 = vector.broadcast %5 : vector<1x128xf32> to vector<8x128xf32>
    %32 = arith.mulf %31, %4 : vector<8x128xf32>
    %33 = arith.mulf %32, %18 : vector<8x128xf32>
    %cst_14 = arith.constant 1.000000e+00 : f32
    %34 = vector.broadcast %cst_14 : f32 to vector<8x128xf32>
    %35 = arith.subf %34, %4 : vector<8x128xf32>
    %36 = arith.mulf %35, %13 : vector<8x128xf32>
    %37 = arith.addf %33, %36 : vector<8x128xf32>
    %38 = arith.mulf %30, %37 : vector<8x128xf32>
    %c0_15 = arith.constant 0 : index
    %c0_16 = arith.constant 0 : index
    %39 = vector.load %arg6[%c0_15, %c0_16] : memref<1x128xf32, #tpu.memory_space<vmem>>, vector<1x128xf32>
    %cst_17 = arith.constant dense<0.000000e+00> : vector<128xf32>
    %40 = vector.multi_reduction <add>, %38, %cst_17 [0] : vector<8x128xf32> to vector<128xf32>
    %41 = vector.shape_cast %40 : vector<128xf32> to vector<1x128xf32>
    %42 = arith.addf %39, %41 : vector<1x128xf32>
    %c0_18 = arith.constant 0 : index
    %c0_19 = arith.constant 0 : index
    %43 = vector.load %arg6[%c0_18, %c0_19] : memref<1x128xf32, #tpu.memory_space<vmem>>, vector<1x128xf32>
    tpu.vector_store %arg6[%c0_18, %c0_19], %42 {strides = array<i32>} : memref<1x128xf32, #tpu.memory_space<vmem>>, vector<1x128xf32>,
    %c0_i32_20 = arith.constant 0 : i32
    %44 = arith.cmpi eq, %arg0, %c0_i32_20 : i32
    %45 = arith.extui %44 : i1 to i32
    %c0_i32_21 = arith.constant 0 : i32
    %46 = arith.cmpi ne, %45, %c0_i32_21 : i32
    scf.if %46 {
      %c0_22 = arith.constant 0 : index
      %c0_23 = arith.constant 0 : index
      %47 = vector.load %arg4[%c0_22, %c0_23] : memref<1x128xf32, #tpu.memory_space<vmem>>, vector<1x128xf32>
      %c0_24 = arith.constant 0 : index
      %c0_25 = arith.constant 0 : index
      %48 = vector.load %arg6[%c0_24, %c0_25] : memref<1x128xf32, #tpu.memory_space<vmem>>, vector<1x128xf32>
      %49 = arith.mulf %48, %47 : vector<1x128xf32>
      %50 = vector.shape_cast %49 : vector<1x128xf32> to vector<1x1x128xf32>
      %cst_26 = arith.constant dense<0.000000e+00> : vector<1xf32>
      %51 = vector.multi_reduction <add>, %50, %cst_26 [1, 2] : vector<1x1x128xf32> to vector<1xf32>
      %52 = vector.shape_cast %51 : vector<1xf32> to vector<1x1x1xf32>
      %53 = vector.extract %52[0, 0, 0] : f32 from vector<1x1x1xf32>
      %cst_27 = arith.constant 9.765625E-4 : f32
      %54 = arith.mulf %53, %cst_27 : f32
      %c0_28 = arith.constant 0 : index
      %c0_29 = arith.constant 0 : index
      %55 = memref.load %arg5[%c0_28, %c0_29] : memref<1x1xf32, #tpu.memory_space<smem>>
      memref.store %54, %arg5[%c0_28, %c0_29] : memref<1x1xf32, #tpu.memory_space<smem>>
    } else {
    }
    return
  }
  func.func @transform_0(%arg0: i32) -> (i32, i32) {
    %c0_i32 = arith.constant 0 : i32
    %c0_i32_0 = arith.constant 0 : i32
    return %arg0, %c0_i32 : i32, i32
  }
  func.func @transform_1(%arg0: i32) -> (i32, i32) {
    %c0_i32 = arith.constant 0 : i32
    %c0_i32_0 = arith.constant 0 : i32
    return %arg0, %c0_i32 : i32, i32
  }
  func.func @transform_2(%arg0: i32) -> (i32, i32) {
    %c0_i32 = arith.constant 0 : i32
    %c0_i32_0 = arith.constant 0 : i32
    %c0_i32_1 = arith.constant 0 : i32
    return %c0_i32, %c0_i32_0 : i32, i32
  }
  func.func @transform_3(%arg0: i32) -> (i32, i32) {
    %c0_i32 = arith.constant 0 : i32
    %c0_i32_0 = arith.constant 0 : i32
    %c0_i32_1 = arith.constant 0 : i32
    return %c0_i32, %c0_i32_0 : i32, i32
  }
  func.func @transform_4(%arg0: i32) -> (i32, i32) {
    %c0_i32 = arith.constant 0 : i32
    %c0_i32_0 = arith.constant 0 : i32
    %c0_i32_1 = arith.constant 0 : i32
    return %c0_i32, %c0_i32_0 : i32, i32
  }
}

</mosaic_0001>

<llo_original>
// kernel: tpu_custom_call.1
$region0: #{tpu_custom_call.1}
  #allocation0 [shape = 'u32[]', space=smem, size = 0x4, offset = 0x4, fixed_abs, tag = 'smem constant byte address 0x4 - core index']
  #allocation1 [shape = 'u32[72,128]{1,0:T(1,128)}', space=vmem, size = 0x9000, scoped, tag = 'internal scratch']
  #allocation2 [shape = 'f32[1,128]{1,0:T(1,128)}', space=vmem, size = 0x200, scoped, tag = 'scratch operand']
  %s0 = inlined_call_operand.hbm [shape: f32[8,128], index: 0, kind: input, shape index: {}]
  %s1 = inlined_call_operand.hbm [shape: f32[8,128], index: 1, kind: input, shape index: {}]
  %s2 = inlined_call_operand.vmem [shape: f32[1,128], index: 2, kind: input, shape index: {}]
  %s3 = inlined_call_operand.vmem [shape: f32[1,128], index: 3, kind: input, shape index: {}]
  %s4 = inlined_call_operand.hbm [shape: f32[1,1], index: 4, kind: output, shape index: {}]
  %s5 = sld [smem:[#allocation0]]
  $region42: #{tpu_custom_call.1} parent=0
    _
  %s7 = ssub.s32 1, %s5
  %s8 = scalar_select 0, %s7, %s5
  $region1: #{tpu_custom_call.1} parent=0
    #allocation3 [shape = 'u8[4096]{0}', space=vmem, size = 0x1000, scoped, tag = 'input window, operand 0, single buffered']
    #allocation4 [shape = 's32[1]{0}', space=sflag, size = 0x4, scoped, tag = 'scoped memory for tpu_custom_call.1']
    #allocation5 [shape = 's32[1]{0}', space=sflag, size = 0x4, scoped, tag = 'scoped memory for tpu_custom_call.1']
    #allocation6 [shape = 'u8[4096]{0}', space=vmem, size = 0x1000, scoped, tag = 'input window, operand 1, single buffered']
    #allocation7 [shape = 's32[1]{0}', space=sflag, size = 0x4, scoped, tag = 'scoped memory for tpu_custom_call.1']
    #allocation8 [shape = 'u8[512]{0}', space=smem, size = 0x200, scoped, tag = 'output window, operand 0, single buffered']
    %9 = vsyncpa [#allocation4], 0
    %10 = vsyncpa [#allocation7], 0
    %11 = vsyncpa [#allocation5], 0
    // Predicated region
    $region2: #{tpu_custom_call.1} parent=1 // pred_check
      _
    $region3: #{tpu_custom_call.1} parent=1 // pred_check_branch
      %13 = sbr.rel (0) target = $region5
    $region4: #{tpu_custom_call.1} parent=1 // pred_region
      %15 = vsyncadd [#allocation4], 0
      %s17 = sshll.u32 %s0, 4
      %s18 = int_to_ptr.hbm [resolvable:$true] %s17
      %s19 = sshll.u32 [#allocation3], 4
      %s20 = int_to_ptr.vmem [resolvable:$true] %s19
      %22 = dma.hbm_to_vmem [thread:$0]  %s18, 128, %s20, [#allocation4]
    $region5: #{tpu_custom_call.1} parent=1 // pred_fallthru
      _
    // Predicated region
    $region6: #{tpu_custom_call.1} parent=1 // pred_check
      _
    $region7: #{tpu_custom_call.1} parent=1 // pred_check_branch
      %24 = sbr.rel (0) target = $region9
    $region8: #{tpu_custom_call.1} parent=1 // pred_region
      %26 = vsyncadd [#allocation7], 0
      %s28 = sshll.u32 %s1, 4
      %s29 = int_to_ptr.hbm [resolvable:$true] %s28
      %s30 = sshll.u32 [#allocation6], 4
      %s31 = int_to_ptr.vmem [resolvable:$true] %s30
      %33 = dma.hbm_to_vmem [thread:$0]  %s29, 128, %s31, [#allocation7]
    $region9: #{tpu_custom_call.1} parent=1 // pred_fallthru
      _
    // Predicated region
    $region10: #{tpu_custom_call.1} parent=1 // pred_check
      _
    $region11: #{tpu_custom_call.1} parent=1 // pred_check_branch
      %35 = sbr.rel (0) target = $region13
    $region12: #{tpu_custom_call.1} parent=1 // pred_region
      _
    $region13: #{tpu_custom_call.1} parent=1 // pred_fallthru
      _
    // Predicated region
    $region14: #{tpu_custom_call.1} parent=1 // pred_check
      _
    $region15: #{tpu_custom_call.1} parent=1 // pred_check_branch
      %37 = sbr.rel (0) target = $region17
    $region16: #{tpu_custom_call.1} parent=1 // pred_region
      _
    $region17: #{tpu_custom_call.1} parent=1 // pred_fallthru
      _
    // Predicated region
    $region18: #{tpu_custom_call.1} parent=1 // pred_check
      _
    $region19: #{tpu_custom_call.1} parent=1 // pred_check_branch
      %39 = sbr.rel (0) target = $region21
    $region20: #{tpu_custom_call.1} parent=1 // pred_region
      %41 = dma.done [#allocation4], 128
    $region21: #{tpu_custom_call.1} parent=1 // pred_fallthru
      _
    // Predicated region
    $region22: #{tpu_custom_call.1} parent=1 // pred_check
      _
    $region23: #{tpu_custom_call.1} parent=1 // pred_check_branch
      %43 = sbr.rel (0) target = $region25
    $region24: #{tpu_custom_call.1} parent=1 // pred_region
      %45 = dma.done [#allocation7], 128
    $region25: #{tpu_custom_call.1} parent=1 // pred_fallthru
      _
    %p46 = scmp.eq.s32.totalorder 0, 0
    // Predicated region
    $region26: #{tpu_custom_call.1} parent=1 // pred_check
      %p47 = pneg %p46
    $region27: #{tpu_custom_call.1} parent=1 // pred_check_branch
      %49 = sbr.rel (%p47) target = $region29
    $region28: #{tpu_custom_call.1} parent=1 // pred_region
      %50 = vst [vmem:[#allocation2] sm:$0x1] 0.0
    $region29: #{tpu_custom_call.1} parent=1 // pred_fallthru
      _
    %v51 = vld [vmem:[#allocation3] sm:$0xff]
    %v52 = vld [vmem:[#allocation6] sm:$0xff]
    %v53 = vld [vmem:[%s2] sm:$0x1]
    %v54 = vand.u32 2147483647, %v51
    %v55 = vsub.f32 0.0, %v54
    %v56 = vmul.f32 %v55, 1.442695
    %v57 = vpow.pop %v56
    %v58 = vadd.f32 %v57, 1.0
    %v59 = vlog2.pop %v58
    %v60 = vmul.f32 %v59, 0.6931472
    %v61 = vmul.f32 -0.5, %v57
    %v62 = vadd.f32 %v61, 1.0
    %v63 = vmul.f32 %v62, %v57
    %v64 = vand.u32 2147483647, %v57
    %vm65 = vcmp.lt.f32.partialorder %v64, 0.0004427343
    %v66 = vsel %vm65, %v63, %v60
    %v67 = vmax.f32 %v51, 0.0
    %v68 = vadd.f32 %v67, %v66
    %v69 = vsub.f32 0.0, %v51
    %v70 = vmax.f32 %v69, 0.0
    %v71 = vadd.f32 %v70, %v66
    %vm72 = vcmp.ge.f32.partialorder %v51, 0.0
    %v73 = vsel %vm72, 1.0, %v57
    %v74 = vadd.f32 %v57, 1.0
    %v75 = vrcp.pop %v74
    %v76 = vmul.f32 %v74, %v75
    %v77 = vsub.f32 1.0, %v76
    %v78 = vmul.f32 %v75, %v77
    %v79 = vadd.f32 %v75, %v78
    %vm80 = vweird.f32 %v74
    %vm81 = vweird.f32 %v75
    %vm82 = vmor %vm80, %vm81
    %v83 = vsel %vm82, %v75, %v79
    %v84 = vand.u32 2147483647, %v74
    %vm85 = vcmp.eq.f32.partialorder %v84, 8.507059e+37
    %v86 = vand.u32 %v74, 2147483648
    %v87 = vor.u32 1.1754944e-38, %v86
    %v88 = vsel %vm85, %v87, %v83
    %v89 = vmul.f32 %v73, %v88
    %vm90 = vcmp.eq.f32.partialorder %v52, 1.0
    %v91 = vsub.f32 1.0, %v89
    %v92 = vsel %vm90, %v91, %v89
    %v94 = vperm.slane %v53, 0
    %v96 = vmul.f32 %v94, %v52
    %v97 = vmul.f32 %v96, %v71
    %v98 = vsub.f32 1.0, %v52
    %v99 = vmul.f32 %v98, %v68
    %v100 = vadd.f32 %v97, %v99
    %v101 = vmul.f32 %v92, %v100
    %v102 = vld [vmem:[#allocation2] sm:$0x1]
    %v103 = vrot.slane %v101, 4
    %v104 = vadd.f32 %v101, %v103
    %v105 = vrot.slane %v104, 2
    %v106 = vadd.f32 %v104, %v105
    %v107 = vrot.slane %v106, 1
    %v108 = vadd.f32 %v106, %v107
    %v109 = vadd.f32 %v102, %v108
    %110 = vst [vmem:[#allocation2] sm:$0x1] %v109
    // Predicated region
    $region30: #{tpu_custom_call.1} parent=1 // pred_check
      %p111 = pneg %p46
    $region31: #{tpu_custom_call.1} parent=1 // pred_check_branch
      %113 = sbr.rel (%p111) target = $region33
    $region32: #{tpu_custom_call.1} parent=1 // pred_region
      %v114 = vld [vmem:[%s3] sm:$0x1]
      %v115 = vld [vmem:[#allocation2] sm:$0x1]
      %v116 = vmul.f32 %v115, %v114
      %vm117 = vcmask 1040384
      %v118 = vsel %vm117, %v116, 0.0
      %119 = vadd.xlane.f32.xlu0 %v118
      %v120 = vpop.xlane.xlu0 %119
      %v121 = vrot.slane %v120, 4
      %v122 = vadd.f32 %v120, %v121
      %v123 = vrot.slane %v122, 2
      %v124 = vadd.f32 %v122, %v123
      %v125 = vrot.slane %v124, 1
      %v126 = vadd.f32 %v124, %v125
      %s127 = vtos %v126
      %s128 = smul.f32 %s127, 0.0009765625
      %s129 = scalar_lea.smem [#allocation8], 0
      %130 = sst [smem:[%s129]] %s128
    $region33: #{tpu_custom_call.1} parent=1 // pred_fallthru
      _
    // Predicated region
    $region34: #{tpu_custom_call.1} parent=1 // pred_check
      _
    $region35: #{tpu_custom_call.1} parent=1 // pred_check_branch
      %132 = sbr.rel (0) target = $region37
    $region36: #{tpu_custom_call.1} parent=1 // pred_region
      %134 = vsyncadd [#allocation5], 0
      %s136 = sshll.u32 %s4, 4
      %s137 = int_to_ptr.hbm [resolvable:$true] %s136
      %139 = dma.smem_to_hbm [#allocation8], 16, %s137, [#allocation5]
    $region37: #{tpu_custom_call.1} parent=1 // pred_fallthru
      _
    // Predicated region
    $region38: #{tpu_custom_call.1} parent=1 // pred_check
      _
    $region39: #{tpu_custom_call.1} parent=1 // pred_check_branch
      %141 = sbr.rel (0) target = $region41
    $region40: #{tpu_custom_call.1} parent=1 // pred_region
      %143 = dma.done [#allocation5], 16
    $region41: #{tpu_custom_call.1} parent=1 // pred_fallthru
      _
    %144 = sfence
    %145 = vsyncpa [#allocation4], 1
    %146 = vsyncpa [#allocation7], 1
    %147 = vsyncpa [#allocation5], 1

</llo_original>
